<compile_context>
chip_gen: v7x
topology: tpu7x:2x2x1
jax: 0.10.0
libtpu: 0.0.40
codegen_flags: <defaults>
</compile_context>

<pallas_src>
import functools

import jax
import jax.numpy as jnp
from jax.experimental import pallas as pl
from jax.experimental.pallas import tpu as pltpu


_LANES = 128
_MAX_TILE_ROWS = 4096   # 4096 x 128 x 4 B = 2 MiB per f32 input block


def _row_align(dtype) -> int:
    # Sublane packing: 32-bit dtypes need 8-row tiles, 16-bit need 16, 8-bit 32.
    itemsize = jnp.dtype(dtype).itemsize
    return 8 * max(1, 4 // itemsize)


def _stable_bce(x, t):
    # Numerically-stable BCE with logits (== sigmoid + BCE for non-extreme x).
    return jnp.maximum(x, 0.0) - x * t + jnp.log1p(jnp.exp(-jnp.abs(x)))


def _focal_bce_kernel(x_ref, t_ref, o_ref, *, n_blocks, tile_rows, rows_in_last):
    j = pl.program_id(0)

    @pl.when(j == 0)
    def _():
        o_ref[...] = jnp.zeros_like(o_ref)

    def fold(x_v, t_v):
        # Elementwise BCE, then fold the (r,128) tile into the vreg-shaped
        # (8,128) accumulator with plain VALU adds; the single cross-lane
        # reduction happens once in the wrapper.
        x = x_v.astype(jnp.float32)
        t = t_v.astype(jnp.float32)
        bce = _stable_bce(x, t)
        r = bce.shape[0]
        return bce.reshape(r // 8, 8, _LANES).sum(axis=0)

    if rows_in_last == tile_rows:
        # Exact tiling: every block is full -> single unmasked path.
        o_ref[...] += fold(x_ref[...], t_ref[...])
    else:
        # Interior blocks: unmasked fast path.
        @pl.when(j < n_blocks - 1)
        def _fast():
            o_ref[...] += fold(x_ref[...], t_ref[...])

        # Final partial block: static row slice (no iota/where, no index math).
        @pl.when(j == n_blocks - 1)
        def _boundary():
            o_ref[...] += fold(x_ref[:rows_in_last, :], t_ref[:rows_in_last, :])


def focal_loss_pallas(inputs, targets, alpha_f=0.8, gamma_f=2.0):
    """Focal loss over logits `inputs` and binary `targets` (any matching shape)."""
    x = inputs.reshape(-1)
    t = targets.reshape(-1)
    n_valid = x.shape[0]

    align = max(_row_align(x.dtype), _row_align(t.dtype))
    min_elems = align * _LANES
    n_main = (n_valid // min_elems) * min_elems   # aligned prefix -> kernel
    n_tail = n_valid - n_main                     # < min_elems -> jnp epilogue

    total = jnp.float32(0.0)

    if n_main:
        rows = n_main // _LANES                   # multiple of `align`
        tile_rows = min(_MAX_TILE_ROWS, rows)
        n_blocks = pl.cdiv(rows, tile_rows)
        rows_in_last = rows - (n_blocks - 1) * tile_rows

        x2 = x[:n_main].reshape(rows, _LANES)
        t2 = t[:n_main].reshape(rows, _LANES)

        kernel = functools.partial(
            _focal_bce_kernel,
            n_blocks=n_blocks,
            tile_rows=tile_rows,
            rows_in_last=rows_in_last,
        )

        partials = pl.pallas_call(
            kernel,
            out_shape=jax.ShapeDtypeStruct((8, _LANES), jnp.float32),
            grid_spec=pltpu.PrefetchScalarGridSpec(
                num_scalar_prefetch=0,
                grid=(n_blocks,),
                in_specs=[
                    pl.BlockSpec((tile_rows, _LANES), lambda j: (j, 0)),
                    pl.BlockSpec((tile_rows, _LANES), lambda j: (j, 0)),
                ],
                out_specs=pl.BlockSpec((8, _LANES), lambda j: (0, 0)),
            ),
            compiler_params=pltpu.CompilerParams(
                dimension_semantics=("arbitrary",),
                vmem_limit_bytes=32 * 1024 * 1024,
            ),
        )(x2, t2)

        total = total + jnp.sum(partials, dtype=jnp.float32)

    if n_tail:
        # Tiny unaligned tail (< align*128 elements): fold it in with jnp
        # instead of padding+copying the whole input arrays.
        xt = x[n_main:].astype(jnp.float32)
        tt = t[n_main:].astype(jnp.float32)
        total = total + jnp.sum(_stable_bce(xt, tt), dtype=jnp.float32)

    # TODO(synk): for tiny-N latency-critical calls, fuse this epilogue into
    # the last grid step instead of a separate XLA op.
    bce = total / jnp.float32(n_valid)            # reduction='mean'
    bce_exp = jnp.exp(-bce)
    return jnp.float32(alpha_f) * (1.0 - bce_exp) ** jnp.float32(gamma_f) * bce


def focal_loss_ref(inputs, targets, alpha_f=0.8, gamma_f=2.0):
    # Matches torch: sigmoid -> binary_cross_entropy (log clamped at -100) -> mean.
    p = jax.nn.sigmoid(inputs.reshape(-1).astype(jnp.float32))
    t = targets.reshape(-1).astype(jnp.float32)
    bce_elem = -(t * jnp.maximum(jnp.log(p), -100.0)
                 + (1.0 - t) * jnp.maximum(jnp.log(1.0 - p), -100.0))
    bce = jnp.mean(bce_elem)
    return alpha_f * (1.0 - jnp.exp(-bce)) ** gamma_f * bce


if __name__ == "__main__":
    key = jax.random.PRNGKey(0)

    # Main case: NCHW logits / binary targets, aligned size (no tail path).
    k1, k2 = jax.random.split(key)
    inputs = jax.random.normal(k1, (2, 4, 16, 16), dtype=jnp.float32)
    targets = (jax.random.uniform(k2, (2, 4, 16, 16)) > 0.5).astype(jnp.float32)
    loss = jax.block_until_ready(focal_loss_pallas(inputs, targets))
    ref = focal_loss_ref(inputs, targets)
    assert jnp.allclose(loss, ref, rtol=1e-4, atol=1e-6), (loss, ref)

    # Unaligned case: exercises the aligned-prefix kernel + jnp tail epilogue.
    k3, k4 = jax.random.split(k1)
    inputs_u = jax.random.normal(k3, (3, 5, 7, 11), dtype=jnp.float32)
    targets_u = (jax.random.uniform(k4, (3, 5, 7, 11)) > 0.5).astype(jnp.float32)
    loss_u = jax.block_until_ready(focal_loss_pallas(inputs_u, targets_u))
    ref_u = focal_loss_ref(inputs_u, targets_u)
    assert jnp.allclose(loss_u, ref_u, rtol=1e-4, atol=1e-6), (loss_u, ref_u)

    # Multi-block case with a partial final block: 2*4*240*320 = 614400 elems
    # -> 4800 rows -> blocks of 4096 + a 704-row boundary block (masked path).
    k5, k6 = jax.random.split(k3)
    inputs_b = jax.random.normal(k5, (2, 4, 240, 320), dtype=jnp.float32)
    targets_b = (jax.random.uniform(k6, (2, 4, 240, 320)) > 0.5).astype(jnp.float32)
    loss_b = jax.block_until_ready(focal_loss_pallas(inputs_b, targets_b))
    ref_b = focal_loss_ref(inputs_b, targets_b)
    assert jnp.allclose(loss_b, ref_b, rtol=1e-4, atol=1e-6), (loss_b, ref_b)

    # bf16 pass-through: logits/targets stream at 16 bits, upcast in-kernel.
    k7, k8 = jax.random.split(k5)
    inputs_h = jax.random.normal(k7, (2, 4, 16, 16), dtype=jnp.bfloat16)
    targets_h = (jax.random.uniform(k8, (2, 4, 16, 16)) > 0.5).astype(jnp.bfloat16)
    loss_h = jax.block_until_ready(focal_loss_pallas(inputs_h, targets_h))
    ref_h = focal_loss_ref(inputs_h, targets_h)
    assert jnp.allclose(loss_h, ref_h, rtol=1e-4, atol=1e-6), (loss_h, ref_h)

    print("KERNEL_OK")
</pallas_src>

<mosaic_0001>
module attributes {stable_mosaic.version = 11 : i64} {
  func.func @_focal_bce_kernel(%arg0: i32, %arg1: memref<16x128xf32, #tpu.memory_space<vmem>>, %arg2: memref<16x128xf32, #tpu.memory_space<vmem>>, %arg3: memref<8x128xf32, #tpu.memory_space<vmem>>) attributes {dimension_semantics = [#tpu.dimension_semantics<arbitrary>], iteration_bounds = array<i64: 1>, scalar_prefetch = 0 : i64, scratch_operands = 0 : i64, tpu.core_type = #tpu.core_type<tc>, window_params = [{transform_indices = @transform_0, window_bounds = array<i64: 16, 128>}, {transform_indices = @transform_1, window_bounds = array<i64: 16, 128>}, {pipeline_mode = #tpu.pipeline_mode<synchronous>, transform_indices = @transform_2, window_bounds = array<i64: 8, 128>}]} {
    %c0_i32 = arith.constant 0 : i32
    %0 = arith.cmpi eq, %arg0, %c0_i32 : i32
    %1 = arith.extui %0 : i1 to i32
    %c0_i32_0 = arith.constant 0 : i32
    %2 = arith.cmpi ne, %1, %c0_i32_0 : i32
    scf.if %2 {
      %cst_10 = arith.constant 0.000000e+00 : f32
      %20 = vector.broadcast %cst_10 : f32 to vector<8x128xf32>
      %c0_11 = arith.constant 0 : index
      %c0_12 = arith.constant 0 : index
      %21 = vector.load %arg3[%c0_11, %c0_12] : memref<8x128xf32, #tpu.memory_space<vmem>>, vector<8x128xf32>
      tpu.vector_store %arg3[%c0_11, %c0_12], %20 {strides = array<i32>} : memref<8x128xf32, #tpu.memory_space<vmem>>, vector<8x128xf32>,
    } else {
    }
    %c0 = arith.constant 0 : index
    %c0_1 = arith.constant 0 : index
    %3 = vector.load %arg3[%c0, %c0_1] : memref<8x128xf32, #tpu.memory_space<vmem>>, vector<8x128xf32>
    %c0_2 = arith.constant 0 : index
    %c0_3 = arith.constant 0 : index
    %4 = vector.load %arg1[%c0_2, %c0_3] : memref<16x128xf32, #tpu.memory_space<vmem>>, vector<16x128xf32>
    %c0_4 = arith.constant 0 : index
    %c0_5 = arith.constant 0 : index
    %5 = vector.load %arg2[%c0_4, %c0_5] : memref<16x128xf32, #tpu.memory_space<vmem>>, vector<16x128xf32>
    %cst = arith.constant 0.000000e+00 : f32
    %6 = vector.broadcast %cst : f32 to vector<16x128xf32>
    %7 = arith.maximumf %4, %6 : vector<16x128xf32>
    %8 = arith.mulf %4, %5 : vector<16x128xf32>
    %9 = arith.subf %7, %8 : vector<16x128xf32>
    %10 = math.absf %4 : vector<16x128xf32>
    %cst_6 = arith.constant 0.000000e+00 : f32
    %11 = vector.broadcast %cst_6 : f32 to vector<16x128xf32>
    %12 = arith.subf %11, %10 : vector<16x128xf32>
    %13 = math.exp %12 : vector<16x128xf32>
    %14 = math.log1p %13 : vector<16x128xf32>
    %15 = arith.addf %9, %14 : vector<16x128xf32>
    %16 = vector.shape_cast %15 : vector<16x128xf32> to vector<2x8x128xf32>
    %cst_7 = arith.constant dense<0.000000e+00> : vector<8x128xf32>
    %17 = vector.multi_reduction <add>, %16, %cst_7 [0] : vector<2x8x128xf32> to vector<8x128xf32>
    %18 = arith.addf %3, %17 : vector<8x128xf32>
    %c0_8 = arith.constant 0 : index
    %c0_9 = arith.constant 0 : index
    %19 = vector.load %arg3[%c0_8, %c0_9] : memref<8x128xf32, #tpu.memory_space<vmem>>, vector<8x128xf32>
    tpu.vector_store %arg3[%c0_8, %c0_9], %18 {strides = array<i32>} : memref<8x128xf32, #tpu.memory_space<vmem>>, vector<8x128xf32>,
    return
  }
  func.func @transform_0(%arg0: i32) -> (i32, i32) {
    %c0_i32 = arith.constant 0 : i32
    %c0_i32_0 = arith.constant 0 : i32
    return %arg0, %c0_i32 : i32, i32
  }
  func.func @transform_1(%arg0: i32) -> (i32, i32) {
    %c0_i32 = arith.constant 0 : i32
    %c0_i32_0 = arith.constant 0 : i32
    return %arg0, %c0_i32 : i32, i32
  }
  func.func @transform_2(%arg0: i32) -> (i32, i32) {
    %c0_i32 = arith.constant 0 : i32
    %c0_i32_0 = arith.constant 0 : i32
    %c0_i32_1 = arith.constant 0 : i32
    return %c0_i32, %c0_i32_0 : i32, i32
  }
}

</mosaic_0001>

<llo_original>
// kernel: tpu_custom_call.1
$region0: #{tpu_custom_call.1}
  #allocation0 [shape = 'u32[]', space=smem, size = 0x4, offset = 0x4, fixed_abs, tag = 'smem constant byte address 0x4 - core index']
  #allocation1 [shape = 'u32[144,128]{1,0:T(1,128)}', space=vmem, size = 0x12000, scoped, tag = 'internal scratch']
  %s0 = inlined_call_operand.hbm [shape: f32[16,128], index: 0, kind: input, shape index: {}]
  %s1 = inlined_call_operand.hbm [shape: f32[16,128], index: 1, kind: input, shape index: {}]
  %s2 = inlined_call_operand.hbm [shape: f32[8,128], index: 2, kind: output, shape index: {}]
  %s3 = sld [smem:[#allocation0]]
  $region30: #{tpu_custom_call.1} parent=0
    _
  %s5 = ssub.s32 1, %s3
  %s6 = scalar_select 0, %s5, %s3
  $region1: #{tpu_custom_call.1} parent=0
    #allocation2 [shape = 'u8[8192]{0}', space=vmem, size = 0x2000, scoped, tag = 'input window, operand 0, single buffered']
    #allocation3 [shape = 's32[1]{0}', space=sflag, size = 0x4, scoped, tag = 'scoped memory for tpu_custom_call.1']
    #allocation4 [shape = 's32[1]{0}', space=sflag, size = 0x4, scoped, tag = 'scoped memory for tpu_custom_call.1']
    #allocation5 [shape = 'u8[8192]{0}', space=vmem, size = 0x2000, scoped, tag = 'input window, operand 1, single buffered']
    #allocation6 [shape = 's32[1]{0}', space=sflag, size = 0x4, scoped, tag = 'scoped memory for tpu_custom_call.1']
    #allocation7 [shape = 'u8[4096]{0}', space=vmem, size = 0x1000, scoped, tag = 'output window, operand 0, single buffered']
    %7 = vsyncpa [#allocation3], 0
    %8 = vsyncpa [#allocation6], 0
    %9 = vsyncpa [#allocation4], 0
    // Predicated region
    $region2: #{tpu_custom_call.1} parent=1 // pred_check
      _
    $region3: #{tpu_custom_call.1} parent=1 // pred_check_branch
      %11 = sbr.rel (0) target = $region5
    $region4: #{tpu_custom_call.1} parent=1 // pred_region
      %s13 = ssub.s32 256, 256
      %14 = vsyncadd [#allocation3], %s13
      %s15 = sshll.u32 [#allocation2], 4
      %s16 = int_to_ptr.vmem [resolvable:$true] %s15
      %21 = dma.hbm_to_vmem [thread:$0]  %s0, 256, %s16, [#allocation3], 128, 128, 8
    $region5: #{tpu_custom_call.1} parent=1 // pred_fallthru
      _
    // Predicated region
    $region6: #{tpu_custom_call.1} parent=1 // pred_check
      _
    $region7: #{tpu_custom_call.1} parent=1 // pred_check_branch
      %23 = sbr.rel (0) target = $region9
    $region8: #{tpu_custom_call.1} parent=1 // pred_region
      %s25 = ssub.s32 256, 256
      %26 = vsyncadd [#allocation6], %s25
      %s27 = sshll.u32 [#allocation5], 4
      %s28 = int_to_ptr.vmem [resolvable:$true] %s27
      %33 = dma.hbm_to_vmem [thread:$0]  %s1, 256, %s28, [#allocation6], 128, 128, 8
    $region9: #{tpu_custom_call.1} parent=1 // pred_fallthru
      _
    // Predicated region
    $region10: #{tpu_custom_call.1} parent=1 // pred_check
      _
    $region11: #{tpu_custom_call.1} parent=1 // pred_check_branch
      %35 = sbr.rel (0) target = $region13
    $region12: #{tpu_custom_call.1} parent=1 // pred_region
      %36 = dma.done [#allocation3], 256
    $region13: #{tpu_custom_call.1} parent=1 // pred_fallthru
      _
    // Predicated region
    $region14: #{tpu_custom_call.1} parent=1 // pred_check
      _
    $region15: #{tpu_custom_call.1} parent=1 // pred_check_branch
      %38 = sbr.rel (0) target = $region17
    $region16: #{tpu_custom_call.1} parent=1 // pred_region
      %39 = dma.done [#allocation6], 256
    $region17: #{tpu_custom_call.1} parent=1 // pred_fallthru
      _
    %p40 = scmp.eq.s32.totalorder 0, 0
    // Predicated region
    $region18: #{tpu_custom_call.1} parent=1 // pred_check
      %p41 = pneg %p40
    $region19: #{tpu_custom_call.1} parent=1 // pred_check_branch
      %43 = sbr.rel (%p41) target = $region21
    $region20: #{tpu_custom_call.1} parent=1 // pred_region
      %44 = vst [vmem:[#allocation7] sm:$0xff] 0.0
    $region21: #{tpu_custom_call.1} parent=1 // pred_fallthru
      _
    %v45 = vld [vmem:[#allocation7] sm:$0xff]
    %v46 = vld [vmem:[#allocation2] sm:$0xff]
    %v47 = vld [vmem:[#allocation2 + $0x8] sm:$0xff]
    %v48 = vld [vmem:[#allocation5] sm:$0xff]
    %v49 = vld [vmem:[#allocation5 + $0x8] sm:$0xff]
    %v50 = vmax.f32 %v46, 0.0
    %v51 = vmax.f32 %v47, 0.0
    %v52 = vmul.f32 %v46, %v48
    %v53 = vmul.f32 %v47, %v49
    %v54 = vsub.f32 %v50, %v52
    %v55 = vsub.f32 %v51, %v53
    %v56 = vand.u32 2147483647, %v46
    %v57 = vand.u32 2147483647, %v47
    %v58 = vsub.f32 0.0, %v56
    %v59 = vsub.f32 0.0, %v57
    %v60 = vmul.f32 %v58, 1.442695
    %v61 = vpow.pop %v60
    %v62 = vmul.f32 %v59, 1.442695
    %v63 = vpow.pop %v62
    %v64 = vadd.f32 %v61, 1.0
    %v65 = vlog2.pop %v64
    %v66 = vmul.f32 %v65, 0.6931472
    %v67 = vmul.f32 -0.5, %v61
    %v68 = vadd.f32 %v67, 1.0
    %v69 = vmul.f32 %v68, %v61
    %v70 = vand.u32 2147483647, %v61
    %vm71 = vcmp.lt.f32.partialorder %v70, 0.0004427343
    %v72 = vsel %vm71, %v69, %v66
    %v73 = vadd.f32 %v63, 1.0
    %v74 = vlog2.pop %v73
    %v75 = vmul.f32 %v74, 0.6931472
    %v76 = vmul.f32 -0.5, %v63
    %v77 = vadd.f32 %v76, 1.0
    %v78 = vmul.f32 %v77, %v63
    %v79 = vand.u32 2147483647, %v63
    %vm80 = vcmp.lt.f32.partialorder %v79, 0.0004427343
    %v81 = vsel %vm80, %v78, %v75
    %v82 = vadd.f32 %v54, %v72
    %v83 = vadd.f32 %v55, %v81
    %v84 = vadd.f32 %v82, %v83
    %v85 = vadd.f32 %v45, %v84
    %86 = vst [vmem:[#allocation7] sm:$0xff] %v85
    // Predicated region
    $region22: #{tpu_custom_call.1} parent=1 // pred_check
      _
    $region23: #{tpu_custom_call.1} parent=1 // pred_check_branch
      %88 = sbr.rel (0) target = $region25
    $region24: #{tpu_custom_call.1} parent=1 // pred_region
      %s90 = ssub.s32 128, 128
      %91 = vsyncadd [#allocation4], %s90
      %s93 = sshll.u32 [#allocation7], 4
      %s94 = int_to_ptr.vmem [resolvable:$true] %s93
      %96 = dma.vmem_to_hbm [thread:$0]  %s94, 128, %s2, [#allocation4]
    $region25: #{tpu_custom_call.1} parent=1 // pred_fallthru
      _
    // Predicated region
    $region26: #{tpu_custom_call.1} parent=1 // pred_check
      _
    $region27: #{tpu_custom_call.1} parent=1 // pred_check_branch
      %98 = sbr.rel (0) target = $region29
    $region28: #{tpu_custom_call.1} parent=1 // pred_region
      %99 = dma.done [#allocation4], 128
    $region29: #{tpu_custom_call.1} parent=1 // pred_fallthru
      _
    %100 = vsyncpa [#allocation3], 1
    %101 = vsyncpa [#allocation6], 1
    %102 = vsyncpa [#allocation4], 1

</llo_original>
